<compile_context>
chip_gen: v6e
topology: v6e:2x2x1
jax: 0.10.0
libtpu: 0.0.40
codegen_flags: <defaults>
</compile_context>

<pallas_src>
import functools

import numpy as np
import jax
import jax.numpy as jnp
from jax.experimental import pallas as pl
from jax.experimental.pallas import tpu as pltpu


# ----------------------------- Pallas kernels ------------------------------


def _img_branch_kernel(x_ref, w_ref, b_ref, wo_ref, o_ref):
    # Per-batch: GAP + 1x1 conv (BN folded) + ReLU + image-branch slice of the final conv.
    pooled = jnp.mean(x_ref[...].astype(jnp.float32), axis=(1, 2))             # (1, Cin)
    a = jnp.dot(pooled.astype(jnp.bfloat16), w_ref[...],
                preferred_element_type=jnp.float32)                            # (1, R)
    a = jnp.maximum(a + b_ref[...], 0.0)
    o = jnp.dot(a.astype(jnp.bfloat16), wo_ref[...],
                preferred_element_type=jnp.float32)                            # (1, C_out)
    o_ref[...] = o.reshape(o_ref.shape)


def img_branch_bias(x_nhwc, w_img, b_img, w_out_img):
    """Per-batch (1, C_out) contribution of the image-pooling branch."""
    N, H, W, Cin = x_nhwc.shape
    R = w_img.shape[1]
    C_out = w_out_img.shape[1]
    # TODO(synk): tile H (and Cin) here too if H*W*Cin per batch exceeds VMEM.
    return pl.pallas_call(
        _img_branch_kernel,
        out_shape=jax.ShapeDtypeStruct((N, 1, C_out), jnp.float32),
        grid=(N,),
        in_specs=[
            pl.BlockSpec((1, H, W, Cin), lambda n: (n, 0, 0, 0)),
            pl.BlockSpec((Cin, R), lambda n: (0, 0)),
            pl.BlockSpec((1, R), lambda n: (0, 0)),
            pl.BlockSpec((R, C_out), lambda n: (0, 0)),
        ],
        out_specs=pl.BlockSpec((1, 1, C_out), lambda n: (n, 0, 0)),
        compiler_params=pltpu.CompilerParams(dimension_semantics=("parallel",)),
    )(x_nhwc, w_img, b_img, w_out_img)


def _aspp_fused_kernel(e_ref, xp_hbm, we_ref, w1_ref, wr_ref, bias_ref, wo_ref,
                       imgb_ref, o_ref, band_ref, dma_sem, *,
                       TH, W, Cin, R, rates, rmax):
    # e_ref:    (1, TH*W, 1) f32     resized edge band
    # xp_hbm:   (N, Hp, Wp, Cin) bf16 in HBM (memory_space=pl.ANY)
    # we_ref:   (1, R) f32           edge weight row (BN scale folded)
    # w1_ref:   (Cin, R) bf16        1x1 weight (BN scale folded)
    # wr_ref:   (nr, 9, Cin, R) bf16 dilated weights, per-tap layout (BN scale folded)
    # bias_ref: (5, 1, R) f32        biases, order [edge, 1x1, r6, r12, r18]
    # wo_ref:   (5, R, C_out) bf16   final-conv row blocks, same order
    # imgb_ref: (1, 1, C_out) f32    per-batch image-pooling contribution
    # o_ref:    (1, TH, W, C_out) f32
    # band_ref: (TH+2*rmax, Wp, Cin) bf16 VMEM scratch (halo row-band)
    n = pl.program_id(0)
    b = pl.program_id(1)
    TM = TH * W
    band_rows = TH + 2 * rmax

    # Kick off the halo row-band DMA for this (batch, band).
    row0 = pl.multiple_of(b * TH, TH)
    cp = pltpu.make_async_copy(xp_hbm.at[n, pl.ds(row0, band_rows)], band_ref, dma_sem)
    cp.start()

    # Edge branch while the band is in flight (needs no image data).  Bias+ReLU in f32,
    # MXU matmul in bf16 with f32 accumulation.
    e_col = e_ref[...].reshape(TM, 1)
    edge_act = jnp.maximum(e_col * we_ref[...] + bias_ref[0], 0.0)             # (TM, R)
    out = jnp.dot(edge_act.astype(jnp.bfloat16), wo_ref[0],
                  preferred_element_type=jnp.float32)                          # (TM, C_out)

    cp.wait()

    def band2d(r0, c0):  # static offsets -> (TM, Cin) bf16 tap
        return band_ref[pl.ds(r0, TH), pl.ds(c0, W), :].reshape(TM, Cin)

    # 1x1 branch: interior of the halo band (no separate unpadded-x stream).
    pre = jnp.dot(band2d(rmax, rmax), w1_ref[...], preferred_element_type=jnp.float32)
    act = jnp.maximum(pre + bias_ref[1], 0.0)
    out += jnp.dot(act.astype(jnp.bfloat16), wo_ref[1], preferred_element_type=jnp.float32)

    # Dilated 3x3 branches: per-tap accumulation (no im2col concat), then per-branch
    # bias+ReLU and accumulation into the final-conv output (no 5R-lane concat).
    for k, r in enumerate(rates):
        acc = jnp.zeros((TM, R), jnp.float32)
        t = 0
        for i in range(3):
            for j in range(3):
                tap = band2d(rmax + (i - 1) * r, rmax + (j - 1) * r)
                acc += jnp.dot(tap, wr_ref[k, t], preferred_element_type=jnp.float32)
                t += 1
        act = jnp.maximum(acc + bias_ref[2 + k], 0.0)
        out += jnp.dot(act.astype(jnp.bfloat16), wo_ref[2 + k],
                       preferred_element_type=jnp.float32)

    out += imgb_ref[0]                                                         # img-pool bias
    o_ref[...] = out.reshape(1, TH, W, -1).astype(o_ref.dtype)


# ------------------------------ glue helpers --------------------------------


def bilinear_matrix(out_size, in_size):
    """Row-stochastic bilinear interpolation matrix (align_corners=True)."""
    if in_size == 1:
        return np.ones((out_size, 1), np.float32)
    A = np.zeros((out_size, in_size), np.float32)
    scale = (in_size - 1) / (out_size - 1) if out_size > 1 else 0.0
    for o in range(out_size):
        src = o * scale
        i0 = min(int(np.floor(src)), in_size - 1)
        i1 = min(i0 + 1, in_size - 1)
        f = src - i0
        A[o, i0] += 1.0 - f
        A[o, i1] += f
    return A


def aspp_forward(x_nchw, edge_nchw, params, rates, th=8):
    """Fused ASPP forward.  All conv/BN/ReLU/final-conv math runs in Pallas kernels; the
    NCHW<->NHWC transposes, the single max-rate zero pad and the 1-channel edge bilinear
    resize are host-side glue."""
    N, Cin, H, W = x_nchw.shape
    R = params["w_1x1"].shape[1]
    C_out = params["w_out"].shape[1]
    nr = len(rates)
    rmax = max(rates)
    assert H % th == 0, (H, th)   # sweep th: larger bands amortize grid-step overhead
    nb = H // th
    TM = th * W

    # NHWC, bf16 activations for the MXU (f32 accumulation stays in-kernel).
    x = jnp.transpose(x_nchw, (0, 2, 3, 1)).astype(jnp.bfloat16)
    xp = jnp.pad(x, ((0, 0), (rmax, rmax), (rmax, rmax), (0, 0)))              # pad ONCE
    Hp, Wp = H + 2 * rmax, W + 2 * rmax

    # Fold BN scale into conv weights (eval-mode BN); only bias + ReLU remain in-kernel.
    w1 = (params["w_1x1"] * params["s_1x1"][None, :]).astype(jnp.bfloat16)     # (Cin, R)
    wr = jnp.stack([
        (params["w_rates"][k] * params["s_rates"][k][None, None, None, :]
         ).reshape(9, Cin, R)
        for k in range(nr)
    ]).astype(jnp.bfloat16)                                                    # (nr,9,Cin,R)
    we = (params["w_edge"] * params["s_edge"][None, :]).astype(jnp.float32)    # (1, R) VPU
    w_img = (params["w_img"] * params["s_img"][None, :]).astype(jnp.bfloat16)  # (Cin, R)
    b_img = params["b_img"].reshape(1, R).astype(jnp.float32)

    # Per-branch biases in fused order [edge, 1x1, r6, r12, r18].
    bias5 = jnp.stack(
        [params["b_edge"], params["b_1x1"]] + [params["b_rates"][k] for k in range(nr)]
    ).reshape(2 + nr, 1, R).astype(jnp.float32)

    # Final-conv rows: PyTorch concat order is [img, edge, 1x1, r6, r12, r18].
    w_out = params["w_out"].astype(jnp.float32)
    w_out_img = w_out[:R].astype(jnp.bfloat16)                                 # (R, C_out)
    w_out5 = w_out[R:].reshape(2 + nr, R, C_out).astype(jnp.bfloat16)          # (5,R,C_out)

    # Edge bilinear resize (align_corners=True), single channel -> JAX glue.
    He, We_ = edge_nchw.shape[2], edge_nchw.shape[3]
    Ah = jnp.asarray(bilinear_matrix(H, He))
    Aw = jnp.asarray(bilinear_matrix(W, We_))
    edge_hw = jnp.einsum("hp,npq,wq->nhw", Ah, edge_nchw[:, 0].astype(jnp.float32), Aw)
    edge_col = edge_hw.reshape(N, H * W, 1)

    # Image-pooling branch (constant over H,W) -> per-batch (1, C_out) bias.
    img_bias = img_branch_bias(x, w_img, b_img, w_out_img)                     # (N,1,C_out)

    band_rows = th + 2 * rmax
    flops = N * H * W * (2 * Cin * R + nr * 2 * 9 * Cin * R + 2 * R
                         + (2 + nr) * 2 * R * C_out)
    bytes_accessed = (2 * N * nb * band_rows * Wp * Cin          # bf16 halo bands
                      + 4 * edge_col.size
                      + 2 * (w1.size + wr.size + w_out5.size)
                      + 4 * (we.size + bias5.size + img_bias.size)
                      + 4 * N * H * W * C_out)                   # f32 output writeback

    # NOTE: output kept f32 to match module semantics; switch out_shape/astype to bf16 if
    # the consumer tolerates it (halves the largest HBM write stream).
    out_nhwc = pl.pallas_call(
        functools.partial(_aspp_fused_kernel, TH=th, W=W, Cin=Cin, R=R,
                          rates=tuple(rates), rmax=rmax),
        out_shape=jax.ShapeDtypeStruct((N, H, W, C_out), jnp.float32),
        grid=(N, nb),
        in_specs=[
            pl.BlockSpec((1, TM, 1), lambda n, b: (n, b, 0)),                  # edge band
            pl.BlockSpec(memory_space=pl.ANY),                                 # xp in HBM
            pl.BlockSpec((1, R), lambda n, b: (0, 0)),                         # we
            pl.BlockSpec((Cin, R), lambda n, b: (0, 0)),                       # w1
            pl.BlockSpec((nr, 9, Cin, R), lambda n, b: (0, 0, 0, 0)),          # wr
            pl.BlockSpec((2 + nr, 1, R), lambda n, b: (0, 0, 0)),              # biases
            pl.BlockSpec((2 + nr, R, C_out), lambda n, b: (0, 0, 0)),          # w_out rows
            pl.BlockSpec((1, 1, C_out), lambda n, b: (n, 0, 0)),               # img bias
        ],
        out_specs=pl.BlockSpec((1, th, W, C_out), lambda n, b: (n, b, 0, 0)),
        scratch_shapes=[
            pltpu.VMEM((band_rows, Wp, Cin), jnp.bfloat16),                    # halo band
            pltpu.SemaphoreType.DMA,
        ],
        compiler_params=pltpu.CompilerParams(
            # batch axis first so megacore/v7x sharding splits whole images per core
            dimension_semantics=("parallel", "parallel"),
            # <=48 MiB keeps v7x (64 MiB/TC) safe; raise toward 64-96 MiB on v5e/v6e.
            vmem_limit_bytes=48 * 1024 * 1024),
        cost_estimate=pl.CostEstimate(flops=int(flops), transcendentals=0,
                                      bytes_accessed=int(bytes_accessed)),
    )(edge_col, xp, we, w1, wr, bias5, w_out5, img_bias)

    return jnp.transpose(out_nhwc, (0, 3, 1, 2))                               # NCHW


# --------------------------- pure-JAX reference -----------------------------


def aspp_reference(x_nchw, edge_nchw, params, rates):
    N, Cin, H, W = x_nchw.shape
    x = jnp.transpose(x_nchw, (0, 2, 3, 1))
    R = params["w_1x1"].shape[1]

    def pw(x2d, w, s, b, relu=True):
        y = (x2d @ w) * s[None, :] + b[None, :]
        return jnp.maximum(y, 0.0) if relu else y

    pooled = jnp.mean(x, axis=(1, 2))
    img_nc = pw(pooled, params["w_img"], params["s_img"], params["b_img"])
    img_feat = jnp.broadcast_to(img_nc[:, None, None, :], (N, H, W, R))

    He, We = edge_nchw.shape[2], edge_nchw.shape[3]
    Ah = jnp.asarray(bilinear_matrix(H, He))
    Aw = jnp.asarray(bilinear_matrix(W, We))
    edge_hw = jnp.einsum("hp,npq,wq->nhw", Ah, edge_nchw[:, 0], Aw)
    edge_feat = pw(edge_hw.reshape(-1, 1), params["w_edge"],
                   params["s_edge"], params["b_edge"]).reshape(N, H, W, R)

    br0 = pw(x.reshape(-1, Cin), params["w_1x1"],
             params["s_1x1"], params["b_1x1"]).reshape(N, H, W, R)

    brs = []
    for k, r in enumerate(rates):
        xp = jnp.pad(x, ((0, 0), (r, r), (r, r), (0, 0)))
        acc = jnp.zeros((N, H, W, R), jnp.float32)
        for i in range(3):
            for j in range(3):
                patch = xp[:, i * r:i * r + H, j * r:j * r + W, :]
                acc = acc + jnp.einsum("nhwc,co->nhwo", patch, params["w_rates"][k][i, j])
        acc = jnp.maximum(acc * params["s_rates"][k] + params["b_rates"][k], 0.0)
        brs.append(acc)

    cat = jnp.concatenate([img_feat, edge_feat, br0] + brs, axis=-1)
    out = jnp.einsum("nhwc,co->nhwo", cat, params["w_out"])
    return jnp.transpose(out, (0, 3, 1, 2))


# ----------------------------------- main ------------------------------------


if __name__ == "__main__":
    key = jax.random.PRNGKey(0)
    N, Cin, H, W = 2, 8, 16, 16
    R = 32                 # reduction_dim (scaled down from 256)
    rates = [6, 12, 18]
    He, We = 8, 8
    C_out = 128            # scaled down from hardcoded 1024 (input 6*R scaled from 1536)

    keys = iter(jax.random.split(key, 32))

    x_nchw = jax.random.normal(next(keys), (N, Cin, H, W), jnp.float32)
    edge_nchw = jax.random.normal(next(keys), (N, 1, He, We), jnp.float32)

    def make_bn(k, c, eps=1e-5):
        k1, k2, k3, k4 = jax.random.split(k, 4)
        gamma = 1.0 + 0.1 * jax.random.normal(k1, (c,), jnp.float32)
        beta = 0.1 * jax.random.normal(k2, (c,), jnp.float32)
        mean = 0.1 * jax.random.normal(k3, (c,), jnp.float32)
        var = jnp.abs(jax.random.normal(k4, (c,), jnp.float32)) + 0.5
        scale = gamma / jnp.sqrt(var + eps)
        bias = beta - mean * scale
        return scale, bias

    s_1x1, b_1x1 = make_bn(next(keys), R)
    s_img, b_img = make_bn(next(keys), R)
    s_edge, b_edge = make_bn(next(keys), R)
    bn_rates = [make_bn(next(keys), R) for _ in rates]

    params = {
        "w_1x1": 0.1 * jax.random.normal(next(keys), (Cin, R), jnp.float32),
        "s_1x1": s_1x1, "b_1x1": b_1x1,
        "w_rates": [0.1 * jax.random.normal(next(keys), (3, 3, Cin, R), jnp.float32)
                    for _ in rates],
        "s_rates": [sb[0] for sb in bn_rates],
        "b_rates": [sb[1] for sb in bn_rates],
        "w_img": 0.1 * jax.random.normal(next(keys), (Cin, R), jnp.float32),
        "s_img": s_img, "b_img": b_img,
        "w_edge": 0.1 * jax.random.normal(next(keys), (1, R), jnp.float32),
        "s_edge": s_edge, "b_edge": b_edge,
        "w_out": 0.05 * jax.random.normal(next(keys), (6 * R, C_out), jnp.float32),
    }

    out = aspp_forward(x_nchw, edge_nchw, params, rates, th=8)
    out = jax.block_until_ready(out)
    assert out.shape == (N, C_out, H, W), out.shape
    assert out.dtype == jnp.float32

    ref = jax.block_until_ready(aspp_reference(x_nchw, edge_nchw, params, rates))
    # bf16 MXU inputs (f32 accumulation) vs f32 reference -> looser tolerance than v1.
    assert np.allclose(np.asarray(out), np.asarray(ref), atol=5e-2, rtol=5e-2), (
        float(np.max(np.abs(np.asarray(out) - np.asarray(ref)))))

    print("KERNEL_OK")
</pallas_src>

<mosaic_0001>
module attributes {stable_mosaic.version = 11 : i64} {
  func.func @_img_branch_kernel(%arg0: i32, %arg1: memref<1x16x16x8xbf16, #tpu.memory_space<vmem>>, %arg2: memref<8x32xbf16, #tpu.memory_space<vmem>>, %arg3: memref<1x32xf32, #tpu.memory_space<vmem>>, %arg4: memref<32x128xbf16, #tpu.memory_space<vmem>>, %arg5: memref<1x1x128xf32, #tpu.memory_space<vmem>>) attributes {dimension_semantics = [#tpu.dimension_semantics<parallel>], iteration_bounds = array<i64: 2>, scalar_prefetch = 0 : i64, scratch_operands = 0 : i64, tpu.core_type = #tpu.core_type<tc>, window_params = [{transform_indices = @transform_0, window_bounds = array<i64: 1, 16, 16, 8>}, {pipeline_mode = #tpu.pipeline_mode<synchronous>, transform_indices = @transform_1, window_bounds = array<i64: 8, 32>}, {pipeline_mode = #tpu.pipeline_mode<synchronous>, transform_indices = @transform_2, window_bounds = array<i64: 1, 32>}, {pipeline_mode = #tpu.pipeline_mode<synchronous>, transform_indices = @transform_3, window_bounds = array<i64: 32, 128>}, {transform_indices = @transform_4, window_bounds = array<i64: 1, 1, 128>}]} {
    %c0 = arith.constant 0 : index
    %c0_0 = arith.constant 0 : index
    %c0_1 = arith.constant 0 : index
    %c0_2 = arith.constant 0 : index
    %0 = vector.load %arg1[%c0, %c0_0, %c0_1, %c0_2] : memref<1x16x16x8xbf16, #tpu.memory_space<vmem>>, vector<1x16x16x8xbf16>
    %1 = arith.extf %0 : vector<1x16x16x8xbf16> to vector<1x16x16x8xf32>
    %cst = arith.constant dense<0.000000e+00> : vector<1x8xf32>
    %2 = vector.multi_reduction <add>, %1, %cst [1, 2] : vector<1x16x16x8xf32> to vector<1x8xf32>
    %cst_3 = arith.constant 2.560000e+02 : f32
    %3 = vector.broadcast %cst_3 : f32 to vector<1x8xf32>
    %4 = arith.divf %2, %3 : vector<1x8xf32>
    %5 = arith.truncf %4 : vector<1x8xf32> to vector<1x8xbf16>
    %c0_4 = arith.constant 0 : index
    %c0_5 = arith.constant 0 : index
    %6 = vector.load %arg2[%c0_4, %c0_5] : memref<8x32xbf16, #tpu.memory_space<vmem>>, vector<8x32xbf16>
    %cst_6 = arith.constant dense<0.000000e+00> : vector<1x32xf32>
    %7 = tpu.matmul %5, %6, %cst_6 {dimension_numbers = #tpu.dot_dimension_numbers<[1], [0], [0], [1], [0, 0, 1, 1], [], []>} : vector<1x8xbf16>, vector<8x32xbf16>, vector<1x32xf32> -> vector<1x32xf32>
    %c0_7 = arith.constant 0 : index
    %c0_8 = arith.constant 0 : index
    %8 = vector.load %arg3[%c0_7, %c0_8] : memref<1x32xf32, #tpu.memory_space<vmem>>, vector<1x32xf32>
    %9 = arith.addf %7, %8 : vector<1x32xf32>
    %cst_9 = arith.constant 0.000000e+00 : f32
    %10 = vector.broadcast %cst_9 : f32 to vector<1x32xf32>
    %11 = arith.maximumf %9, %10 : vector<1x32xf32>
    %12 = arith.truncf %11 : vector<1x32xf32> to vector<1x32xbf16>
    %c0_10 = arith.constant 0 : index
    %c0_11 = arith.constant 0 : index
    %13 = vector.load %arg4[%c0_10, %c0_11] : memref<32x128xbf16, #tpu.memory_space<vmem>>, vector<32x128xbf16>
    %cst_12 = arith.constant dense<0.000000e+00> : vector<1x128xf32>
    %14 = tpu.matmul %12, %13, %cst_12 {dimension_numbers = #tpu.dot_dimension_numbers<[1], [0], [0], [1], [0, 0, 1, 1], [], []>} : vector<1x32xbf16>, vector<32x128xbf16>, vector<1x128xf32> -> vector<1x128xf32>
    %15 = vector.shape_cast %14 : vector<1x128xf32> to vector<1x1x128xf32>
    %c0_13 = arith.constant 0 : index
    %c0_14 = arith.constant 0 : index
    %c0_15 = arith.constant 0 : index
    %16 = vector.load %arg5[%c0_13, %c0_14, %c0_15] : memref<1x1x128xf32, #tpu.memory_space<vmem>>, vector<1x1x128xf32>
    tpu.vector_store %arg5[%c0_13, %c0_14, %c0_15], %15 {strides = array<i32>} : memref<1x1x128xf32, #tpu.memory_space<vmem>>, vector<1x1x128xf32>,
    return
  }
  func.func @transform_0(%arg0: i32) -> (i32, i32, i32, i32) {
    %c0_i32 = arith.constant 0 : i32
    %c0_i32_0 = arith.constant 0 : i32
    %c0_i32_1 = arith.constant 0 : i32
    %c0_i32_2 = arith.constant 0 : i32
    return %arg0, %c0_i32, %c0_i32_0, %c0_i32_1 : i32, i32, i32, i32
  }
  func.func @transform_1(%arg0: i32) -> (i32, i32) {
    %c0_i32 = arith.constant 0 : i32
    %c0_i32_0 = arith.constant 0 : i32
    %c0_i32_1 = arith.constant 0 : i32
    return %c0_i32, %c0_i32_0 : i32, i32
  }
  func.func @transform_2(%arg0: i32) -> (i32, i32) {
    %c0_i32 = arith.constant 0 : i32
    %c0_i32_0 = arith.constant 0 : i32
    %c0_i32_1 = arith.constant 0 : i32
    return %c0_i32, %c0_i32_0 : i32, i32
  }
  func.func @transform_3(%arg0: i32) -> (i32, i32) {
    %c0_i32 = arith.constant 0 : i32
    %c0_i32_0 = arith.constant 0 : i32
    %c0_i32_1 = arith.constant 0 : i32
    return %c0_i32, %c0_i32_0 : i32, i32
  }
  func.func @transform_4(%arg0: i32) -> (i32, i32, i32) {
    %c0_i32 = arith.constant 0 : i32
    %c0_i32_0 = arith.constant 0 : i32
    %c0_i32_1 = arith.constant 0 : i32
    return %arg0, %c0_i32, %c0_i32_0 : i32, i32, i32
  }
}

</mosaic_0001>

<llo_original>
// kernel: tpu_custom_call.1
$region0: #{tpu_custom_call.1}
  #allocation0 [shape = 'u32[]', space=smem, size = 0x4, offset = 0x4, fixed_abs, tag = 'smem constant byte address 0x4 - core index']
  #allocation1 [shape = 'u32[144,128]{1,0:T(1,128)}', space=vmem, size = 0x12000, scoped, tag = 'internal scratch']
  %s0 = inlined_call_operand.vmem [shape: bf16[2,16,16,8], index: 0, kind: input, shape index: {}]
  %s1 = inlined_call_operand.vmem [shape: bf16[8,32], index: 1, kind: input, shape index: {}]
  %s2 = inlined_call_operand.vmem [shape: f32[1,32], index: 2, kind: input, shape index: {}]
  %s3 = inlined_call_operand.vmem [shape: bf16[32,128], index: 3, kind: input, shape index: {}]
  %s4 = inlined_call_operand.hbm [shape: f32[2,1,128], index: 4, kind: output, shape index: {}]
  %s5 = sld [smem:[#allocation0]]
  $region49: #{tpu_custom_call.1} parent=0
    _
  %s7 = ssub.s32 1, %s5
  %s8 = scalar_select 0, %s7, %s5
  $region1: #{tpu_custom_call.1} parent=0
    #allocation2 [shape = 'u8[1024]{0}', space=vmem, size = 0x400, scoped, tag = 'output window, operand 0']
    #allocation3 [shape = 's32[2]{0}', space=sflag, size = 0x8, scoped, tag = 'scoped memory for tpu_custom_call.1']
    %9 = vsyncpa [#allocation3], 0
    %s10 = scalar_lea.sflag [#allocation3], 1
    %11 = vsyncpa %s10, 0
    loop: start=0, step=1, limit=4
    $region2: #{tpu_custom_call.1} parent=1 // loop_pre_header
      _
    $region3: #{tpu_custom_call.1} parent=1 // loop_header
      %s13 = sphi 0, %s17
      %p14 = scmp.ge.s32.totalorder %s13, 4
      %s23 = sphi 0, %s25
      %s26 = sphi 0, %s23
      %s27 = sphi 0, %s26
      %s43 = sphi 0, %s27
      %s47 = sphi 0, %s47
      %s49 = sphi 0, %s47
      %s50 = sphi 0, %s49
      %s64 = sphi 0, %s50
      %s68 = sphi 0, %s68
      %s70 = sphi 0, %s68
      %s71 = sphi 0, %s70
      %s85 = sphi 0, %s71
      %s89 = sphi 0, %s89
      %s91 = sphi 0, %s89
      %s92 = sphi 0, %s91
      %s106 = sphi 0, %s92
      %s112 = sphi 0, %s114
      %s115 = sphi 0, %s112
      %s116 = sphi 0, %s115
      %s132 = sphi 0, %s116
    $region4: #{tpu_custom_call.1} parent=1 // loop_header_branch
      %16 = sbr.rel (%p14) target = $region8
    $region5: #{tpu_custom_call.1} parent=1 // loop_body
      %s18 = ssub.s32 %s13, 1
      %s19 = ssub.s32 %s13, 2
      %s20 = sadd.s32 %s13, 1
      %s21 = ssub.s32 %s13, %s20
      %p22 = scmp.eq.s32.totalorder %s21, 0
      %s24 = sadd.s32 %s23, 1
      %s25 = scalar_select %p22, %s23, %s24
      %p28 = pneg %p22
      %p29 = scmp.eq.s32.totalorder %s13, 1
      %p30 = por %p28, %p29
      %p31 = scmp.ne.s32.totalorder %s23, %s26
      %p32 = scmp.eq.s32.totalorder %s13, 0
      %p33 = por %p31, %p32
      %p34 = scmp.ne.s32.totalorder %s23, %s26
      %p35 = scmp.eq.s32.totalorder %s18, 1
      %p36 = por %p34, %p35
      %p37 = scmp.ne.s32.totalorder %s26, %s27
      %p38 = scmp.eq.s32.totalorder %s18, 0
      %p39 = por %p37, %p38
      %p40 = scmp.ne.s32.totalorder %s26, %s27
      %p41 = scmp.eq.s32.totalorder %s19, 1
      %p42 = por %p40, %p41
      %p44 = scmp.ne.s32.totalorder %s27, %s43
      %p45 = scmp.eq.s32.totalorder %s19, 0
      %p46 = por %p44, %p45
      %s48 = sadd.s32 %s47, 1
      %p51 = scmp.eq.s32.totalorder %s13, 1
      %p52 = scmp.ne.s32.totalorder %s47, %s49
      %p53 = scmp.eq.s32.totalorder %s13, 0
      %p54 = por %p52, %p53
      %p55 = scmp.ne.s32.totalorder %s47, %s49
      %p56 = scmp.eq.s32.totalorder %s18, 1
      %p57 = por %p55, %p56
      %p58 = scmp.ne.s32.totalorder %s49, %s50
      %p59 = scmp.eq.s32.totalorder %s18, 0
      %p60 = por %p58, %p59
      %p61 = scmp.ne.s32.totalorder %s49, %s50
      %p62 = scmp.eq.s32.totalorder %s19, 1
      %p63 = por %p61, %p62
      %p65 = scmp.ne.s32.totalorder %s50, %s64
      %p66 = scmp.eq.s32.totalorder %s19, 0
      %p67 = por %p65, %p66
      %s69 = sadd.s32 %s68, 1
      %p72 = scmp.eq.s32.totalorder %s13, 1
      %p73 = scmp.ne.s32.totalorder %s68, %s70
      %p74 = scmp.eq.s32.totalorder %s13, 0
      %p75 = por %p73, %p74
      %p76 = scmp.ne.s32.totalorder %s68, %s70
      %p77 = scmp.eq.s32.totalorder %s18, 1
      %p78 = por %p76, %p77
      %p79 = scmp.ne.s32.totalorder %s70, %s71
      %p80 = scmp.eq.s32.totalorder %s18, 0
      %p81 = por %p79, %p80
      %p82 = scmp.ne.s32.totalorder %s70, %s71
      %p83 = scmp.eq.s32.totalorder %s19, 1
      %p84 = por %p82, %p83
      %p86 = scmp.ne.s32.totalorder %s71, %s85
      %p87 = scmp.eq.s32.totalorder %s19, 0
      %p88 = por %p86, %p87
      %s90 = sadd.s32 %s89, 1
      %p93 = scmp.eq.s32.totalorder %s13, 1
      %p94 = scmp.ne.s32.totalorder %s89, %s91
      %p95 = scmp.eq.s32.totalorder %s13, 0
      %p96 = por %p94, %p95
      %p97 = scmp.ne.s32.totalorder %s89, %s91
      %p98 = scmp.eq.s32.totalorder %s18, 1
      %p99 = por %p97, %p98
      %p100 = scmp.ne.s32.totalorder %s91, %s92
      %p101 = scmp.eq.s32.totalorder %s18, 0
      %p102 = por %p100, %p101
      %p103 = scmp.ne.s32.totalorder %s91, %s92
      %p104 = scmp.eq.s32.totalorder %s19, 1
      %p105 = por %p103, %p104
      %p107 = scmp.ne.s32.totalorder %s92, %s106
      %p108 = scmp.eq.s32.totalorder %s19, 0
      %p109 = por %p107, %p108
      %s110 = ssub.s32 %s13, %s20
      %p111 = scmp.eq.s32.totalorder %s110, 0
      %s113 = sadd.s32 %s112, 1
      %s114 = scalar_select %p111, %s112, %s113
      %p117 = pneg %p111
      %p118 = scmp.eq.s32.totalorder %s13, 1
      %p119 = por %p117, %p118
      %p120 = scmp.ne.s32.totalorder %s112, %s115
      %p121 = scmp.eq.s32.totalorder %s13, 0
      %p122 = por %p120, %p121
      %p123 = scmp.ne.s32.totalorder %s112, %s115
      %p124 = scmp.eq.s32.totalorder %s18, 1
      %p125 = por %p123, %p124
      %p126 = scmp.ne.s32.totalorder %s115, %s116
      %p127 = scmp.eq.s32.totalorder %s18, 0
      %p128 = por %p126, %p127
      %p129 = scmp.ne.s32.totalorder %s115, %s116
      %p130 = scmp.eq.s32.totalorder %s19, 1
      %p131 = por %p129, %p130
      %p133 = scmp.ne.s32.totalorder %s116, %s132
      %p134 = scmp.eq.s32.totalorder %s19, 0
      %p135 = por %p133, %p134
      %p136 = scmp.le.s32.totalorder 1, %s13
      %p137 = scmp.lt.s32.totalorder %s13, 3
      %p138 = pnand %p136, %p137
      %p139 = pneg %p138
      // Predicated region
      $region9: #{tpu_custom_call.1} parent=5 // pred_check
        _
      $region10: #{tpu_custom_call.1} parent=5 // pred_check_branch
        %141 = sbr.rel (%p138) target = $region12
      $region11: #{tpu_custom_call.1} parent=5 // pred_region
        %s142 = ssub.s32 %s13, 1
        // Predicated region
        $region13: #{tpu_custom_call.1} parent=11 // pred_check
          %p143 = pneg %p60
        $region14: #{tpu_custom_call.1} parent=11 // pred_check_branch
          %145 = sbr.rel (%p143) target = $region16
        $region15: #{tpu_custom_call.1} parent=11 // pred_region
          _
        $region16: #{tpu_custom_call.1} parent=11 // pred_fallthru
          _
        // Predicated region
        $region17: #{tpu_custom_call.1} parent=11 // pred_check
          %p146 = pneg %p81
        $region18: #{tpu_custom_call.1} parent=11 // pred_check_branch
          %148 = sbr.rel (%p146) target = $region20
        $region19: #{tpu_custom_call.1} parent=11 // pred_region
          _
        $region20: #{tpu_custom_call.1} parent=11 // pred_fallthru
          _
        // Predicated region
        $region21: #{tpu_custom_call.1} parent=11 // pred_check
          %p149 = pneg %p102
        $region22: #{tpu_custom_call.1} parent=11 // pred_check_branch
          %151 = sbr.rel (%p149) target = $region24
        $region23: #{tpu_custom_call.1} parent=11 // pred_region
          _
        $region24: #{tpu_custom_call.1} parent=11 // pred_fallthru
          _
      $region12: #{tpu_custom_call.1} parent=5 // pred_fallthru
        _
      %p152 = scmp.lt.s32.totalorder %s13, 2
      // Predicated region
      $region25: #{tpu_custom_call.1} parent=5 // pred_check
        %p153 = pneg %p152
      $region26: #{tpu_custom_call.1} parent=5 // pred_check_branch
        %155 = sbr.rel (%p153) target = $region28
      $region27: #{tpu_custom_call.1} parent=5 // pred_region
        // Predicated region
        $region29: #{tpu_custom_call.1} parent=27 // pred_check
          %p156 = pneg %p33
        $region30: #{tpu_custom_call.1} parent=27 // pred_check_branch
          %158 = sbr.rel (%p156) target = $region32
        $region31: #{tpu_custom_call.1} parent=27 // pred_region
          %p159 = scmp.lt.s32.totalorder %s13, 1
          %s160 = scalar_select %p159, %s13, 1
          %s161 = smul.addr %s160, 32
          %s162 = smul.addr %s161, 4
          %s163 = scalar_lea.vmem %s0, %s162
        $region32: #{tpu_custom_call.1} parent=27 // pred_fallthru
          _
      $region28: #{tpu_custom_call.1} parent=5 // pred_fallthru
        _
      %p164 = scmp.le.s32.totalorder 1, %s13
      %p165 = scmp.lt.s32.totalorder %s13, 3
      %p166 = pnand %p164, %p165
      %p167 = pneg %p166
      // Predicated region
      $region33: #{tpu_custom_call.1} parent=5 // pred_check
        _
      $region34: #{tpu_custom_call.1} parent=5 // pred_check_branch
        %169 = sbr.rel (%p166) target = $region36
      $region35: #{tpu_custom_call.1} parent=5 // pred_region
        %s170 = ssub.s32 %s13, 1
        %p171 = scmp.lt.s32.totalorder %s18, 1
        %s172 = scalar_select %p171, %s18, 1
        %s173 = smul.addr %s172, 32
        %s174 = smul.addr %s173, 4
        %s175 = scalar_lea.vmem %s0, %s174
        %p176 = pneg %p39
        %p177 = pneg %p36
        %p178 = pneg %p60
        %p179 = pneg %p57
        %p180 = pneg %p81
        %p181 = pneg %p78
        %p182 = pneg %p102
        %p183 = pneg %p99
        %p184 = pneg %p128
        %p185 = pneg %p125
        %s186 = sand.u32 %s115, 1
        %s187 = scalar_lea.sflag [#allocation3], %s186
        %s188 = sand.u32 %s115, 1
        %s189 = scalar_lea.vmem [#allocation2], %s188
        %p190 = scmp.lt.s32.totalorder %s18, 1
        %s191 = scalar_select %p190, %s18, 1
        %s192 = smul.addr %s191, 32
        %s193 = smul.addr %s192, 4
        %s194 = scalar_lea.vmem %s0, %s193
        %v196 = vld [vmem:[%s194] sm:$0xf]
        %v197 = vld [vmem:[%s194 + $0x4] sm:$0xf]
        %v198 = vld [vmem:[%s194 + $0x8] sm:$0xf]
        %v199 = vld [vmem:[%s194 + $0xc] sm:$0xf]
        %v200 = vld [vmem:[%s194 + $0x10] sm:$0xf]
        %v201 = vld [vmem:[%s194 + $0x14] sm:$0xf]
        %v202 = vld [vmem:[%s194 + $0x18] sm:$0xf]
        %v203 = vld [vmem:[%s194 + $0x1c] sm:$0xf]
        %v204 = vld [vmem:[%s194 + $0x20] sm:$0xf]
        %v205 = vld [vmem:[%s194 + $0x24] sm:$0xf]
        %v206 = vld [vmem:[%s194 + $0x28] sm:$0xf]
        %v207 = vld [vmem:[%s194 + $0x2c] sm:$0xf]
        %v208 = vld [vmem:[%s194 + $0x30] sm:$0xf]
        %v209 = vld [vmem:[%s194 + $0x34] sm:$0xf]
        %v210 = vld [vmem:[%s194 + $0x38] sm:$0xf]
        %v211 = vld [vmem:[%s194 + $0x3c] sm:$0xf]
        %v212 = vld [vmem:[%s194 + $0x40] sm:$0xf]
        %v213 = vld [vmem:[%s194 + $0x44] sm:$0xf]
        %v214 = vld [vmem:[%s194 + $0x48] sm:$0xf]
        %v215 = vld [vmem:[%s194 + $0x4c] sm:$0xf]
        %v216 = vld [vmem:[%s194 + $0x50] sm:$0xf]
        %v217 = vld [vmem:[%s194 + $0x54] sm:$0xf]
        %v218 = vld [vmem:[%s194 + $0x58] sm:$0xf]
        %v219 = vld [vmem:[%s194 + $0x5c] sm:$0xf]
        %v220 = vld [vmem:[%s194 + $0x60] sm:$0xf]
        %v221 = vld [vmem:[%s194 + $0x64] sm:$0xf]
        %v222 = vld [vmem:[%s194 + $0x68] sm:$0xf]
        %v223 = vld [vmem:[%s194 + $0x6c] sm:$0xf]
        %v224 = vld [vmem:[%s194 + $0x70] sm:$0xf]
        %v225 = vld [vmem:[%s194 + $0x74] sm:$0xf]
        %v226 = vld [vmem:[%s194 + $0x78] sm:$0xf]
        %v227 = vld [vmem:[%s194 + $0x7c] sm:$0xf]
        %v228 = vunpack.c.l.bf16 %v196
        %v229 = vunpack.c.l.bf16 %v197
        %v230 = vunpack.c.l.bf16 %v198
        %v231 = vunpack.c.l.bf16 %v199
        %v232 = vunpack.c.l.bf16 %v200
        %v233 = vunpack.c.l.bf16 %v201
        %v234 = vunpack.c.l.bf16 %v202
        %v235 = vunpack.c.l.bf16 %v203
        %v236 = vunpack.c.l.bf16 %v204
        %v237 = vunpack.c.l.bf16 %v205
        %v238 = vunpack.c.l.bf16 %v206
        %v239 = vunpack.c.l.bf16 %v207
        %v240 = vunpack.c.l.bf16 %v208
        %v241 = vunpack.c.l.bf16 %v209
        %v242 = vunpack.c.l.bf16 %v210
        %v243 = vunpack.c.l.bf16 %v211
        %v244 = vunpack.c.l.bf16 %v212
        %v245 = vunpack.c.l.bf16 %v213
        %v246 = vunpack.c.l.bf16 %v214
        %v247 = vunpack.c.l.bf16 %v215
        %v248 = vunpack.c.l.bf16 %v216
        %v249 = vunpack.c.l.bf16 %v217
        %v250 = vunpack.c.l.bf16 %v218
        %v251 = vunpack.c.l.bf16 %v219
        %v252 = vunpack.c.l.bf16 %v220
        %v253 = vunpack.c.l.bf16 %v221
        %v254 = vunpack.c.l.bf16 %v222
        %v255 = vunpack.c.l.bf16 %v223
        %v256 = vunpack.c.l.bf16 %v224
        %v257 = vunpack.c.l.bf16 %v225
        %v258 = vunpack.c.l.bf16 %v226
        %v259 = vunpack.c.l.bf16 %v227
        %vm260 = vcmask 64512
        %v261 = vsel %vm260, %v228, 0.0
        %v262 = vsel %vm260, %v229, 0.0
        %v263 = vadd.f32 %v261, %v262
        %v264 = vsel %vm260, %v230, 0.0
        %v265 = vadd.f32 %v263, %v264
        %v266 = vsel %vm260, %v231, 0.0
        %v267 = vadd.f32 %v265, %v266
        %v268 = vsel %vm260, %v232, 0.0
        %v269 = vadd.f32 %v267, %v268
        %v270 = vsel %vm260, %v233, 0.0
        %v271 = vadd.f32 %v269, %v270
        %v272 = vsel %vm260, %v234, 0.0
        %v273 = vadd.f32 %v271, %v272
        %v274 = vsel %vm260, %v235, 0.0
        %v275 = vadd.f32 %v273, %v274
        %v276 = vsel %vm260, %v236, 0.0
        %v277 = vadd.f32 %v275, %v276
        %v278 = vsel %vm260, %v237, 0.0
        %v279 = vadd.f32 %v277, %v278
        %v280 = vsel %vm260, %v238, 0.0
        %v281 = vadd.f32 %v279, %v280
        %v282 = vsel %vm260, %v239, 0.0
        %v283 = vadd.f32 %v281, %v282
        %v284 = vsel %vm260, %v240, 0.0
        %v285 = vadd.f32 %v283, %v284
        %v286 = vsel %vm260, %v241, 0.0
        %v287 = vadd.f32 %v285, %v286
        %v288 = vsel %vm260, %v242, 0.0
        %v289 = vadd.f32 %v287, %v288
        %v290 = vsel %vm260, %v243, 0.0
        %v291 = vadd.f32 %v289, %v290
        %v292 = vsel %vm260, %v244, 0.0
        %v293 = vadd.f32 %v291, %v292
        %v294 = vsel %vm260, %v245, 0.0
        %v295 = vadd.f32 %v293, %v294
        %v296 = vsel %vm260, %v246, 0.0
        %v297 = vadd.f32 %v295, %v296
        %v298 = vsel %vm260, %v247, 0.0
        %v299 = vadd.f32 %v297, %v298
        %v300 = vsel %vm260, %v248, 0.0
        %v301 = vadd.f32 %v299, %v300
        %v302 = vsel %vm260, %v249, 0.0
        %v303 = vadd.f32 %v301, %v302
        %v304 = vsel %vm260, %v250, 0.0
        %v305 = vadd.f32 %v303, %v304
        %v306 = vsel %vm260, %v251, 0.0
        %v307 = vadd.f32 %v305, %v306
        %v308 = vsel %vm260, %v252, 0.0
        %v309 = vadd.f32 %v307, %v308
        %v310 = vsel %vm260, %v253, 0.0
        %v311 = vadd.f32 %v309, %v310
        %v312 = vsel %vm260, %v254, 0.0
        %v313 = vadd.f32 %v311, %v312
        %v314 = vsel %vm260, %v255, 0.0
        %v315 = vadd.f32 %v313, %v314
        %v316 = vsel %vm260, %v256, 0.0
        %v317 = vadd.f32 %v315, %v316
        %v318 = vsel %vm260, %v257, 0.0
        %v319 = vadd.f32 %v317, %v318
        %v320 = vsel %vm260, %v258, 0.0
        %v321 = vadd.f32 %v319, %v320
        %v322 = vsel %vm260, %v259, 0.0
        %v323 = vadd.f32 %v321, %v322
        %v324 = vrot.slane %v323, 4
        %v325 = vadd.f32 %v323, %v324
        %v326 = vrot.slane %v325, 2
        %v327 = vadd.f32 %v325, %v326
        %v328 = vrot.slane %v327, 1
        %v329 = vadd.f32 %v327, %v328
        %v330 = vrcp.pop 256.0
        %v331 = vmul.f32 %v329, %v330
        %v332 = vpack.c.bf16 %v331, %v331
        %v333 = vld [vmem:[%s1] sm:$0xf]
        %v334 = vld [vmem:[%s2] sm:$0x1]
        %v336 = vsel %vm260, %v332, 0
        %vm338 = vcmask 1043456
        %v340 = vsel %vm338, %v333, 0
        %342 = vmatprep.subr.bf16.mxu0 0
        %343 = vmatpush1.bf16.msra.mxu0 0
        %344 = vmatprep.subr.bf16.mxu0 0
        %345 = vmatpush1.bf16.msra.mxu0 0
        %346 = vmatprep.subr.bf16.mxu0 0
        %347 = vmatpush1.bf16.msra.mxu0 0
        %348 = vmatprep.subr.bf16.mxu0 0
        %349 = vmatpush1.bf16.msra.mxu0 0
        %350 = vmatprep.subr.bf16.mxu0 0
        %351 = vmatpush1.bf16.msra.mxu0 0
        %352 = vmatprep.subr.bf16.mxu0 0
        %353 = vmatpush1.bf16.msra.mxu0 0
        %354 = vmatprep.subr.bf16.mxu0 0
        %355 = vmatpush1.bf16.msra.mxu0 0
        %356 = vmatprep.subr.bf16.mxu0 0
        %357 = vmatpush1.bf16.msra.mxu0 %v340
        %358 = vmatprep.subr.bf16.mxu0 0
        %359 = vmatpush2.bf16.msra.mxu0 0
        %360 = vmatprep.subr.bf16.mxu0 0
        %361 = vmatpush2.bf16.msra.mxu0 0
        %362 = vmatprep.subr.bf16.mxu0 0
        %363 = vmatpush2.bf16.msra.mxu0 0
        %364 = vmatprep.subr.bf16.mxu0 0
        %365 = vmatpush2.bf16.msra.mxu0 0
        %366 = vmatprep.subr.bf16.mxu0 0
        %367 = vmatpush2.bf16.msra.mxu0 0
        %368 = vmatprep.subr.bf16.mxu0 0
        %369 = vmatpush2.bf16.msra.mxu0 0
        %370 = vmatprep.subr.bf16.mxu0 0
        %371 = vmatpush2.bf16.msra.mxu0 0
        %372 = vmatprep.subr.bf16.mxu0 0
        %373 = vmatpush2.bf16.msra.mxu0 0
        %374 = vmatprep.mubr.bf16.mxu0 0
        %375 = vmatmul.mubr.bf16.gmra.mxu0 %v336
        %v376 = vpop.f32.mrf.mxu0
        %v377 = vadd.f32 %v334, %v376
        %v378 = vpop.f32.mrf.mxu0
        %v379 = vpop.f32.mrf.mxu0
        %v380 = vpop.f32.mrf.mxu0
        %381 = vdwg.mxu0
        %v382 = vmax.f32 %v377, 0.0
        %v383 = vpack.c.bf16 %v382, %v382
        %v384 = vld [vmem:[%s3] sm:$0xf]
        %v385 = vld [vmem:[%s3 + $0x4] sm:$0xf]
        %v386 = vld [vmem:[%s3 + $0x8] sm:$0xf]
        %v387 = vld [vmem:[%s3 + $0xc] sm:$0xf]
        %v392 = vunpack.c.l.b16 %v384
        %v393 = vunpack.c.l.b16 %v385
        %v394 = vunpack.c.l.b16 %v386
        %v395 = vunpack.c.l.b16 %v387
        %v396 = vpack.c.b16 %v393, %v392
        %v397 = vpack.c.b16 %v395, %v394
        %vm400 = vcmask 261120
        %v402 = vsel %vm400, %v383, 0
        %404 = vmatprep.subr.bf16.mxu0 0
        %405 = vmatpush1.bf16.msra.mxu0 0
        %406 = vmatprep.subr.bf16.mxu0 0
        %407 = vmatpush1.bf16.msra.mxu0 0
        %408 = vmatprep.subr.bf16.mxu0 0
        %409 = vmatpush1.bf16.msra.mxu0 0
        %410 = vmatprep.subr.bf16.mxu0 0
        %411 = vmatpush1.bf16.msra.mxu0 0
        %412 = vmatprep.subr.bf16.mxu0 0
        %413 = vmatpush1.bf16.msra.mxu0 0
        %414 = vmatprep.subr.bf16.mxu0 0
        %415 = vmatpush1.bf16.msra.mxu0 0
        %416 = vmatprep.subr.bf16.mxu0 0
        %417 = vmatpush1.bf16.msra.mxu0 %v397
        %418 = vmatprep.subr.bf16.mxu0 0
        %419 = vmatpush1.bf16.msra.mxu0 %v396
        %420 = vmatprep.subr.bf16.mxu0 0
        %421 = vmatpush2.bf16.msra.mxu0 0
        %422 = vmatprep.subr.bf16.mxu0 0
        %423 = vmatpush2.bf16.msra.mxu0 0
        %424 = vmatprep.subr.bf16.mxu0 0
        %425 = vmatpush2.bf16.msra.mxu0 0
        %426 = vmatprep.subr.bf16.mxu0 0
        %427 = vmatpush2.bf16.msra.mxu0 0
        %428 = vmatprep.subr.bf16.mxu0 0
        %429 = vmatpush2.bf16.msra.mxu0 0
        %430 = vmatprep.subr.bf16.mxu0 0
        %431 = vmatpush2.bf16.msra.mxu0 0
        %432 = vmatprep.subr.bf16.mxu0 0
        %433 = vmatpush2.bf16.msra.mxu0 0
        %434 = vmatprep.subr.bf16.mxu0 0
        %435 = vmatpush2.bf16.msra.mxu0 0
        %436 = vmatprep.mubr.bf16.mxu0 0
        %437 = vmatmul.mubr.bf16.gmra.mxu0 %v402
        %v438 = vpop.f32.mrf.mxu0
        %v439 = vadd.f32 0.0, %v438
        %v440 = vpop.f32.mrf.mxu0
        %v441 = vpop.f32.mrf.mxu0
        %v442 = vpop.f32.mrf.mxu0
        %443 = vdwg.mxu0
        %444 = vst [vmem:[%s189] sm:$0x1] %v439
        %s445 = sand.u32 %s115, 1
        %s446 = scalar_lea.sflag [#allocation3], %s445
        %s447 = sand.u32 %s115, 1
        %s448 = scalar_lea.vmem [#allocation2], %s447
        // Predicated region
        $region37: #{tpu_custom_call.1} parent=35 // pred_check
          %p449 = pneg %p125
        $region38: #{tpu_custom_call.1} parent=35 // pred_check_branch
          %451 = sbr.rel (%p449) target = $region40
        $region39: #{tpu_custom_call.1} parent=35 // pred_region
          %s453 = ssub.s32 16, 16
          %454 = vsyncadd %s446, %s453
          %s455 = smul.addr %s18, 16
          %s456 = scalar_lea.hbm %s4, %s455
          %s458 = sshll.u32 %s448, 4
          %s459 = int_to_ptr.vmem [resolvable:$true] %s458
          %461 = dma.vmem_to_hbm [thread:$0]  %s459, 16, %s456, %s446
        $region40: #{tpu_custom_call.1} parent=35 // pred_fallthru
          _
      $region36: #{tpu_custom_call.1} parent=5 // pred_fallthru
        _
      %p462 = scmp.le.s32.totalorder 2, %s13
      // Predicated region
      $region41: #{tpu_custom_call.1} parent=5 // pred_check
        %p463 = pneg %p462
      $region42: #{tpu_custom_call.1} parent=5 // pred_check_branch
        %465 = sbr.rel (%p463) target = $region44
      $region43: #{tpu_custom_call.1} parent=5 // pred_region
        %s466 = ssub.s32 %s13, 2
        // Predicated region
        $region45: #{tpu_custom_call.1} parent=43 // pred_check
          %p467 = pneg %p131
        $region46: #{tpu_custom_call.1} parent=43 // pred_check_branch
          %469 = sbr.rel (%p467) target = $region48
        $region47: #{tpu_custom_call.1} parent=43 // pred_region
          %s470 = sand.u32 %s116, 1
          %s471 = scalar_lea.sflag [#allocation3], %s470
          %s472 = sand.u32 %s116, 1
          %s473 = scalar_lea.vmem [#allocation2], %s472
          %474 = dma.done %s471, 16
        $region48: #{tpu_custom_call.1} parent=43 // pred_fallthru
          _
      $region44: #{tpu_custom_call.1} parent=5 // pred_fallthru
        _
    $region6: #{tpu_custom_call.1} parent=1 // loop_footer
      %s17 = sadd.s32 1, %s13
    $region7: #{tpu_custom_call.1} parent=1 // loop_footer_branch
      %12 = sbr.rel target = $region3
    $region8: #{tpu_custom_call.1} parent=1 // loop_exit
      _
    %475 = vsyncpa [#allocation3], 1
    %s476 = scalar_lea.sflag [#allocation3], 1
    %477 = vsyncpa %s476, 1

</llo_original>
